<compile_context>
chip_gen: v5e
topology: v5e:2x2
jax: 0.10.0
libtpu: 0.0.40
codegen_flags: <defaults>
</compile_context>

<pallas_src>
import functools

import jax
import jax.numpy as jnp
from jax.experimental import pallas as pl
from jax.experimental.pallas import tpu as pltpu


# ----------------------------------------------------------------------------- helpers
def _round_up(a, b):
    return ((a + b - 1) // b) * b


def _vmem_capacity_bytes():
    try:
        cap = int(getattr(pltpu.get_tpu_info(), "vmem_capacity_bytes", 0))
        if cap > 0:
            return cap
    except Exception:
        pass
    return 64 * 1024 * 1024          # conservative fallback (v7x per-TC VMEM)


def _vmem_limit_bytes(cap):
    # <=96 MiB on 128-MiB parts (v5e/v6e), ~48 MiB on 64-MiB parts (v7x).
    return min(cap * 3 // 4, 96 * 1024 * 1024)


def _choose_tiles(n, d_pad, num_segments, itemsize, budget):
    """Pick (ts, tn, dc) from a VMEM budget.  ts mult of 8, tn/dc mult of 128."""
    if d_pad >= 512:
        dc = 512
    elif d_pad >= 256:
        dc = 256
    else:
        dc = 128
    ts = min(512, _round_up(max(num_segments, 1), 8))
    tn = min(512, _round_up(max(n, 1), 128))

    def usage(ts_, tn_, dc_):
        acc = ts_ * dc_ * 4                       # fp32 accumulator (resident)
        out = 2 * ts_ * dc_ * itemsize            # double-buffered output block
        xin = 2 * tn_ * dc_ * itemsize            # double-buffered x tile
        idx = 2 * tn_ * 4                         # double-buffered idx tile
        cnt = 2 * ts_ * 128 * 4 + ts_ * 4         # lane-dense count block + scratch
        return acc + out + xin + idx + cnt

    while usage(ts, tn, dc) > budget * 6 // 10:   # leave headroom for vregs / one-hot temps
        if dc > 128:
            dc //= 2
        elif tn > 128:
            tn //= 2
        elif ts > 8:
            ts = _round_up(max(8, ts // 2), 8)
        else:
            break
    return ts, tn, dc


# ----------------------------------------------------------------------------- scatter-add kernel
def _seg_sum_kernel(blk_lo_ref, nblk_ref, idx_ref, x_ref, *refs, with_counts):
    """Sorted-segment segment-sum via one-hot matmul on the MXU.

    Grid: (S_tiles, D_tiles, K_max); axis 0 = segment tiles, axis 1 = feature chunks,
    axis 2 = per-tile contraction blocks (reduction, resident fp32 accumulator).

    blk_lo_ref / nblk_ref : (S_tiles,) int32 in SMEM (scalar prefetch) — first
        contraction block and number of blocks owned by each segment tile.
    idx_ref : (1, TN)  int32  sorted segment id per row (sentinel = never matches)
    x_ref   : (TN, DC) float  sorted feature rows
    o_ref   : (TS, DC) float  per-segment feature sums
    cnt_ref : (TS, 128) f32   per-segment row counts, broadcast across lanes (lane-dense store)
    """
    if with_counts:
        o_ref, cnt_ref, acc_ref, cnt_acc_ref = refs
    else:
        o_ref, acc_ref = refs
        cnt_ref = cnt_acc_ref = None

    i = pl.program_id(0)
    k = pl.program_id(2)
    nb = nblk_ref[i]

    @pl.when(k == 0)
    def _():
        acc_ref[...] = jnp.zeros_like(acc_ref)
        if with_counts:
            cnt_acc_ref[...] = jnp.zeros_like(cnt_acc_ref)

    @pl.when(k < nb)                                   # skip empty (i, k) steps
    def _():
        ts = acc_ref.shape[0]
        # (ts,1) sublane iota column vs (1,tn) id row — cheaper than a full (ts,tn) iota.
        rows = jax.lax.broadcasted_iota(jnp.int32, (ts, 1), 0) + i * ts
        match = rows == idx_ref[...]                   # (ts, tn) bool
        # TODO(synk): for f32 features a bf16 hi/lo split (two bf16 MXU passes into the
        # fp32 accumulator) would be faster on v6e/v7x; kept single-pass for simplicity.
        onehot = match.astype(x_ref.dtype)
        acc_ref[...] += jnp.dot(onehot, x_ref[...], preferred_element_type=jnp.float32)
        if with_counts:
            # TODO(synk): fp32 count accumulation loses exactness above ~2^24 rows/segment.
            cnt_acc_ref[...] += jnp.sum(match.astype(jnp.float32), axis=1, keepdims=True)

    @pl.when(k == pl.num_programs(2) - 1)
    def _():
        o_ref[...] = acc_ref[...].astype(o_ref.dtype)
        if with_counts:
            cnt_ref[...] = jnp.broadcast_to(cnt_acc_ref[...], cnt_ref.shape)


def pallas_scatter_add(idx, x, num_segments, *, with_counts=False, max_blocks_per_tile=None):
    """Segment-sum: idx (N,) int32 (ids outside [0,S) ignored), x (N,D) -> (S,D)
    [+ counts (S,) int32 when with_counts].  Rows are sorted by segment id so each
    output tile only contracts the blocks that contain its rows."""
    n, d = x.shape
    itemsize = jnp.dtype(x.dtype).itemsize
    cap = _vmem_capacity_bytes()
    vlimit = _vmem_limit_bytes(cap)

    d_pad = _round_up(d, 128)
    ts, tn, dc = _choose_tiles(n, d_pad, num_segments, itemsize, vlimit)
    d_pad = _round_up(d_pad, dc)
    s_pad = _round_up(num_segments, ts)
    n_pad = _round_up(n, tn)
    s_tiles, d_tiles, n_tiles = s_pad // ts, d_pad // dc, n_pad // tn

    # ---- sort rows by segment id (invalid ids -> sentinel, sorted to the end) ----
    sentinel = s_pad                                  # matches no output row
    idx_i32 = idx.astype(jnp.int32)
    idx_safe = jnp.where((idx_i32 >= 0) & (idx_i32 < num_segments), idx_i32, sentinel)
    order = jnp.argsort(idx_safe)
    idx_sorted = idx_safe[order]
    x_sorted = jnp.take(x, order, axis=0)

    idx_pad = jnp.full((1, n_pad), sentinel, jnp.int32).at[0, :n].set(idx_sorted)
    x_pad = x_sorted
    if (n_pad, d_pad) != (n, d):
        x_pad = jnp.pad(x_sorted, ((0, n_pad - n), (0, d_pad - d)))

    # ---- per-segment-tile contraction-block ranges (scalar prefetch) ----
    bounds = jnp.arange(s_tiles + 1, dtype=jnp.int32) * ts
    row_b = jnp.searchsorted(idx_sorted, bounds, side="left").astype(jnp.int32)
    row_lo, row_hi = row_b[:-1], row_b[1:]
    blk_lo = jnp.minimum(row_lo // tn, n_tiles - 1).astype(jnp.int32)
    blk_hi = jnp.where(row_hi > row_lo, (row_hi - 1) // tn + 1, blk_lo)
    nblk = (blk_hi - blk_lo).astype(jnp.int32)

    if max_blocks_per_tile is None:
        # TODO(synk): host sync; pass max_blocks_per_tile=n_tiles for a jit-safe static grid.
        kmax = int(jax.device_get(jnp.max(nblk)))
    else:
        kmax = int(max_blocks_per_tile)
    kmax = min(max(kmax, 1), n_tiles)

    def _blk(i, k, blk_lo_ref, nblk_ref):
        # Clamp past the tile's last block so skipped steps reuse the same block (DMA dedup).
        nb = nblk_ref[i]
        return blk_lo_ref[i] + jnp.minimum(k, jnp.maximum(nb - 1, 0))

    idx_spec = pl.BlockSpec((1, tn), lambda i, j, k, bl, nb: (0, _blk(i, k, bl, nb)))
    x_spec = pl.BlockSpec((tn, dc), lambda i, j, k, bl, nb: (_blk(i, k, bl, nb), j))
    o_spec = pl.BlockSpec((ts, dc), lambda i, j, k, *_: (i, j))

    out_shape = [jax.ShapeDtypeStruct((s_pad, d_pad), x.dtype)]
    out_specs = [o_spec]
    scratch = [pltpu.VMEM((ts, dc), jnp.float32)]
    if with_counts:
        out_shape.append(jax.ShapeDtypeStruct((s_pad, 128), jnp.float32))
        out_specs.append(pl.BlockSpec((ts, 128), lambda i, j, k, *_: (i, 0)))
        scratch.append(pltpu.VMEM((ts, 1), jnp.float32))

    # Counts are recomputed identically for every j; keep j "arbitrary" in that case so
    # the same-value count block is never racily written from two cores.
    dim_sem = ("parallel", "arbitrary" if with_counts else "parallel", "arbitrary")

    res = pl.pallas_call(
        functools.partial(_seg_sum_kernel, with_counts=with_counts),
        out_shape=tuple(out_shape),
        grid_spec=pltpu.PrefetchScalarGridSpec(
            num_scalar_prefetch=2,                     # blk_lo, nblk -> SMEM
            grid=(s_tiles, d_tiles, kmax),             # reduction axis last
            in_specs=[idx_spec, x_spec],
            out_specs=tuple(out_specs),
            scratch_shapes=scratch),
        compiler_params=pltpu.CompilerParams(
            dimension_semantics=dim_sem,
            vmem_limit_bytes=vlimit),
    )(blk_lo, nblk, idx_pad, x_pad)

    if with_counts:
        sums, cnts = res
        return sums[:num_segments, :d], cnts[:num_segments, 0].astype(jnp.int32)
    return res[0][:num_segments, :d]


# ----------------------------------------------------------------------------- gather kernels
def _gather_vmem_kernel(idx_ref, src_ref, o_ref):
    """o[i,:] = src[idx[i],:] with the whole source table resident in VMEM (no DMA)."""
    tm = o_ref.shape[0]
    base = pl.program_id(0) * tm
    for j in range(tm):                                # static unroll
        row = idx_ref[base + j]
        o_ref[pl.ds(j, 1), :] = src_ref[pl.ds(row, 1), :]


def _gather_hbm_kernel(idx_ref, src_hbm, o_ref, sems):
    """Row gather as per-row HBM DMAs written directly into the output tile."""
    tm = o_ref.shape[0]
    base = pl.program_id(0) * tm
    copies = []
    for j in range(tm):                                # issue everything, then wait
        row = idx_ref[base + j]
        cp = pltpu.make_async_copy(src_hbm.at[pl.ds(row, 1), :],
                                   o_ref.at[pl.ds(j, 1), :],
                                   sems.at[j])
        cp.start()
        copies.append(cp)
    for cp in copies:
        cp.wait()


def pallas_gather(idx, src, *, tm_max=64, force_hbm=False):
    """idx (N,) int32, src (S,D) -> (N,D) = src[idx].  Indices are clamped to [0,S)
    (PyTorch fancy indexing would raise on OOB ids; we clamp instead of faulting)."""
    s, d = src.shape
    n = idx.shape[0]
    itemsize = jnp.dtype(src.dtype).itemsize
    cap = _vmem_capacity_bytes()
    vlimit = _vmem_limit_bytes(cap)

    d_pad = _round_up(d, 128)
    tm = min(tm_max, _round_up(n, 8))
    n_pad = _round_up(n, tm)

    idx_pad = jnp.zeros((n_pad,), jnp.int32).at[:n].set(
        jnp.clip(idx.astype(jnp.int32), 0, s - 1))
    src_pad = src if d_pad == d else jnp.pad(src, ((0, 0), (0, d_pad - d)))

    src_bytes = s * d_pad * itemsize
    out_tile_bytes = tm * d_pad * itemsize
    use_vmem = (not force_hbm) and (2 * src_bytes + 2 * out_tile_bytes <= vlimit // 2)

    if use_vmem:
        out = pl.pallas_call(
            _gather_vmem_kernel,
            out_shape=jax.ShapeDtypeStruct((n_pad, d_pad), src.dtype),
            grid_spec=pltpu.PrefetchScalarGridSpec(
                num_scalar_prefetch=1,                           # idx -> SMEM
                grid=(n_pad // tm,),
                in_specs=[pl.BlockSpec((s, d_pad), lambda i, idx_ref: (0, 0))],  # resident
                out_specs=pl.BlockSpec((tm, d_pad), lambda i, idx_ref: (i, 0))),
            compiler_params=pltpu.CompilerParams(
                dimension_semantics=("parallel",),
                vmem_limit_bytes=vlimit),
        )(idx_pad, src_pad)
    else:
        out = pl.pallas_call(
            _gather_hbm_kernel,
            out_shape=jax.ShapeDtypeStruct((n_pad, d_pad), src.dtype),
            grid_spec=pltpu.PrefetchScalarGridSpec(
                num_scalar_prefetch=1,
                grid=(n_pad // tm,),
                in_specs=[pl.BlockSpec(memory_space=pl.ANY)],    # src stays in HBM
                out_specs=pl.BlockSpec((tm, d_pad), lambda i, idx_ref: (i, 0)),
                scratch_shapes=[pltpu.SemaphoreType.DMA((tm,))]),
            compiler_params=pltpu.CompilerParams(
                dimension_semantics=("parallel",),
                vmem_limit_bytes=vlimit),
        )(idx_pad, src_pad)

    return out[:n, :d]


# ----------------------------------------------------------------------------- module
class LouvainPoolingPallas:
    """JAX/Pallas re-implementation of LouvainPooling's numeric forward semantics.

    The PyTorch module has no learned parameters, so there is nothing to load."""

    def __init__(self, edge_aggr="add", node_aggr="sum", remove_self_loop=True):
        assert edge_aggr == "add" and node_aggr == "sum"
        self.edge_aggr = edge_aggr
        self.node_aggr = node_aggr
        self.remove_self_loop = remove_self_loop

    # ---- __merge_edges__ / compute_new_edges ----------------------------------
    def forward(self, src, dst, batch_num_nodes, cluster, num_clusters, edge_feat):
        """Returns (intra_graph, inter_graph, cluster, new_edge_feat).

        Graph structures are returned as plain (src, dst) index arrays.  new_edge_feat
        is the dense [C*C, De] coalesced ('add') table; self-loop pair rows are zeroed
        when remove_self_loop=True and intra_graph['mask'] marks existing pairs."""
        num_nodes = cluster.shape[0]
        C = num_clusters

        # --- coalesce(cluster[edges], edge_feat, op='add') -> sorted-segment scatter-add
        src_c = cluster[src]
        dst_c = cluster[dst]
        # TODO(synk): int32 pair ids overflow once num_clusters > ~46340 (C^2 > 2^31).
        pair_id = src_c.astype(jnp.int32) * C + dst_c.astype(jnp.int32)      # (E,)
        new_edge_feat, pair_count = pallas_scatter_add(
            pair_id, edge_feat, C * C, with_counts=True)

        if self.remove_self_loop:
            sl = (jnp.arange(C * C) // C) == (jnp.arange(C * C) % C)
            new_edge_feat = jnp.where(sl[:, None], 0.0, new_edge_feat)
            pair_count = jnp.where(sl, 0, pair_count)

        intra_src = jnp.arange(C * C, dtype=jnp.int32) // C
        intra_dst = jnp.arange(C * C, dtype=jnp.int32) % C
        intra_mask = pair_count > 0

        # --- inter graph (bipartite original-node <-> cluster-node), glue -------
        # TODO(synk): get_index_of_fused_groups is unavailable; old node indices are
        #             taken as arange(num_nodes), matching the common case.
        new_src = jnp.arange(num_nodes, dtype=jnp.int32)
        offsets = jnp.cumsum(jnp.asarray(batch_num_nodes, jnp.int32))        # (G,)
        gid = jnp.searchsorted(offsets, new_src, side="right")               # graph id per node
        new_dst = cluster.astype(jnp.int32) + offsets[gid]

        def fuse(x, y, nn):
            z = jnp.zeros((2 * nn,), x.dtype)
            z = z.at[0::2].set(x)
            z = z.at[1::2].set(y)
            return z

        inter_src = fuse(new_src, new_dst, num_nodes)
        inter_dst = fuse(new_dst, new_src, num_nodes)

        cluster_score = jnp.ones((C,), jnp.float32)

        intra_graph = dict(src=intra_src, dst=intra_dst, mask=intra_mask,
                           num_nodes=C, cluster_score=cluster_score)
        inter_graph = dict(src=inter_src, dst=inter_dst,
                           num_nodes=num_nodes + C)
        return intra_graph, inter_graph, cluster, new_edge_feat

    # ---- pool: scatter_add(x, cluster), no counts needed -----------------------
    def pool(self, x, cluster, num_clusters):
        return pallas_scatter_add(cluster, x, num_clusters, with_counts=False)

    # ---- unpool: x[cluster] ----------------------------------------------------
    def unpool(self, x, cluster):
        return pallas_gather(cluster, x)


# ----------------------------------------------------------------------------- main
if __name__ == "__main__":
    key = jax.random.PRNGKey(0)

    # Small batched graph: 2 graphs x 8 nodes = 16 nodes, 16 edges per graph.
    N_PER_G, N_GRAPHS = 8, 2
    N = N_PER_G * N_GRAPHS
    E_PER_G = 16
    DN, DE = 32, 8
    batch_num_nodes = [N_PER_G, N_PER_G]

    k1, k2, k3, _ = jax.random.split(key, 4)
    srcs, dsts = [], []
    for g in range(N_GRAPHS):
        kk1, kk2 = jax.random.split(jax.random.fold_in(k1, g))
        srcs.append(jax.random.randint(kk1, (E_PER_G,), 0, N_PER_G) + g * N_PER_G)
        dsts.append(jax.random.randint(kk2, (E_PER_G,), 0, N_PER_G) + g * N_PER_G)
    src = jnp.concatenate(srcs).astype(jnp.int32)
    dst = jnp.concatenate(dsts).astype(jnp.int32)

    node_feat = jax.random.normal(k2, (N, DN), jnp.float32)
    edge_feat = jax.random.normal(k3, (src.shape[0], DE), jnp.float32)

    # TODO(synk): Louvain community detection (community_louvain on a networkx graph)
    # is a host-side sequential algorithm with no Pallas equivalent; use a deterministic
    # synthetic partition (2 clusters per graph) instead.
    cluster = (jnp.arange(N, dtype=jnp.int32) // 4)      # graph0 -> {0,1}, graph1 -> {2,3}
    num_clusters = 4

    layer = LouvainPoolingPallas()

    intra_g, inter_g, cluster_out, new_edge_feat = layer.forward(
        src, dst, batch_num_nodes, cluster, num_clusters, edge_feat)
    pooled = layer.pool(node_feat, cluster, num_clusters)             # (4, 32)
    unpooled = layer.unpool(pooled, cluster)                          # (16, 32) — VMEM gather
    unpooled_hbm = pallas_gather(cluster, pooled, force_hbm=True)     # exercise HBM DMA path

    jax.block_until_ready((new_edge_feat, pooled, unpooled, unpooled_hbm,
                           intra_g["src"], intra_g["mask"], inter_g["src"]))

    # correctness checks against plain-JAX references
    pooled_ref = jax.ops.segment_sum(node_feat, cluster, num_segments=num_clusters)
    assert jnp.allclose(pooled, pooled_ref, atol=1e-5)

    unpooled_ref = pooled_ref[cluster]
    assert jnp.allclose(unpooled, unpooled_ref, atol=1e-5)
    assert jnp.allclose(unpooled_hbm, unpooled_ref, atol=1e-5)

    pair_id = cluster[src] * num_clusters + cluster[dst]
    ef_ref = jax.ops.segment_sum(edge_feat, pair_id, num_segments=num_clusters ** 2)
    sl = (jnp.arange(num_clusters ** 2) // num_clusters) == (jnp.arange(num_clusters ** 2) % num_clusters)
    ef_ref = jnp.where(sl[:, None], 0.0, ef_ref)
    assert jnp.allclose(new_edge_feat, ef_ref, atol=1e-5)

    cnt_ref = jnp.zeros((num_clusters ** 2,), jnp.int32).at[pair_id].add(1)
    cnt_ref = jnp.where(sl, 0, cnt_ref)
    assert jnp.array_equal(intra_g["mask"], cnt_ref > 0)

    print("KERNEL_OK")
</pallas_src>

<mosaic_0001>
module attributes {stable_mosaic.version = 11 : i64} {
  func.func @_seg_sum_kernel(%arg0: i32, %arg1: i32, %arg2: i32, %arg3: memref<1xi32, #tpu.memory_space<smem>>, %arg4: memref<1xi32, #tpu.memory_space<smem>>, %arg5: memref<1x128xi32, #tpu.memory_space<vmem>>, %arg6: memref<128x128xf32, #tpu.memory_space<vmem>>, %arg7: memref<16x128xf32, #tpu.memory_space<vmem>>, %arg8: memref<16x128xf32, #tpu.memory_space<vmem>>, %arg9: memref<16x128xf32, #tpu.memory_space<vmem>>, %arg10: memref<16x1xf32, #tpu.memory_space<vmem>>) attributes {dimension_semantics = [#tpu.dimension_semantics<parallel>, #tpu.dimension_semantics<arbitrary>, #tpu.dimension_semantics<arbitrary>], iteration_bounds = array<i64: 1, 1, 1>, scalar_prefetch = 2 : i64, scratch_operands = 2 : i64, tpu.core_type = #tpu.core_type<tc>, window_params = [{transform_indices = @transform_0, window_bounds = array<i64: 1, 128>}, {transform_indices = @transform_1, window_bounds = array<i64: 128, 128>}, {transform_indices = @transform_2, window_bounds = array<i64: 16, 128>}, {transform_indices = @transform_3, window_bounds = array<i64: 16, 128>}]} {
    %0 = arith.index_cast %arg0 : i32 to index
    %1 = memref.load %arg4[%0] : memref<1xi32, #tpu.memory_space<smem>>
    %c0_i32 = arith.constant 0 : i32
    %2 = arith.cmpi eq, %arg2, %c0_i32 : i32
    %3 = arith.extui %2 : i1 to i32
    %c0_i32_0 = arith.constant 0 : i32
    %4 = arith.cmpi ne, %3, %c0_i32_0 : i32
    scf.if %4 {
      %cst = arith.constant 0.000000e+00 : f32
      %11 = vector.broadcast %cst : f32 to vector<16x128xf32>
      %c0 = arith.constant 0 : index
      %c0_4 = arith.constant 0 : index
      %12 = vector.load %arg9[%c0, %c0_4] : memref<16x128xf32, #tpu.memory_space<vmem>>, vector<16x128xf32>
      tpu.vector_store %arg9[%c0, %c0_4], %11 {strides = array<i32>} : memref<16x128xf32, #tpu.memory_space<vmem>>, vector<16x128xf32>,
      %cst_5 = arith.constant 0.000000e+00 : f32
      %13 = vector.broadcast %cst_5 : f32 to vector<16x1xf32>
      %c0_6 = arith.constant 0 : index
      %c0_7 = arith.constant 0 : index
      %14 = vector.load %arg10[%c0_6, %c0_7] : memref<16x1xf32, #tpu.memory_space<vmem>>, vector<16x1xf32>
      tpu.vector_store %arg10[%c0_6, %c0_7], %13 {strides = array<i32>} : memref<16x1xf32, #tpu.memory_space<vmem>>, vector<16x1xf32>,
    } else {
    }
    %5 = arith.cmpi slt, %arg2, %1 : i32
    %6 = arith.extui %5 : i1 to i32
    %c0_i32_1 = arith.constant 0 : i32
    %7 = arith.cmpi ne, %6, %c0_i32_1 : i32
    scf.if %7 {
      %11 = tpu.iota {dimensions = array<i32: 0>} : vector<16x1xi32>
      %c16_i32 = arith.constant 16 : i32
      %12 = arith.muli %arg0, %c16_i32 : i32
      %13 = vector.broadcast %12 : i32 to vector<16x1xi32>
      %14 = arith.addi %11, %13 : vector<16x1xi32>
      %c0 = arith.constant 0 : index
      %c0_4 = arith.constant 0 : index
      %15 = vector.load %arg5[%c0, %c0_4] : memref<1x128xi32, #tpu.memory_space<vmem>>, vector<1x128xi32>
      %16 = vector.broadcast %14 : vector<16x1xi32> to vector<16x128xi32>
      %17 = vector.broadcast %15 : vector<1x128xi32> to vector<16x128xi32>
      %18 = arith.cmpi eq, %16, %17 : vector<16x128xi32>
      %19 = arith.extui %18 : vector<16x128xi1> to vector<16x128xi32>
      %20 = arith.sitofp %19 : vector<16x128xi32> to vector<16x128xf32>
      %c0_5 = arith.constant 0 : index
      %c0_6 = arith.constant 0 : index
      %21 = vector.load %arg9[%c0_5, %c0_6] : memref<16x128xf32, #tpu.memory_space<vmem>>, vector<16x128xf32>
      %c0_7 = arith.constant 0 : index
      %c0_8 = arith.constant 0 : index
      %22 = vector.load %arg6[%c0_7, %c0_8] : memref<128x128xf32, #tpu.memory_space<vmem>>, vector<128x128xf32>
      %cst = arith.constant dense<0.000000e+00> : vector<16x128xf32>
      %23 = tpu.matmul %20, %22, %cst {dimension_numbers = #tpu.dot_dimension_numbers<[1], [0], [0], [1], [0, 0, 1, 1], [], []>} : vector<16x128xf32>, vector<128x128xf32>, vector<16x128xf32> -> vector<16x128xf32>
      %24 = arith.addf %21, %23 : vector<16x128xf32>
      %c0_9 = arith.constant 0 : index
      %c0_10 = arith.constant 0 : index
      %25 = vector.load %arg9[%c0_9, %c0_10] : memref<16x128xf32, #tpu.memory_space<vmem>>, vector<16x128xf32>
      tpu.vector_store %arg9[%c0_9, %c0_10], %24 {strides = array<i32>} : memref<16x128xf32, #tpu.memory_space<vmem>>, vector<16x128xf32>,
      %c0_11 = arith.constant 0 : index
      %c0_12 = arith.constant 0 : index
      %26 = vector.load %arg10[%c0_11, %c0_12] : memref<16x1xf32, #tpu.memory_space<vmem>>, vector<16x1xf32>
      %27 = arith.extui %18 : vector<16x128xi1> to vector<16x128xi32>
      %28 = arith.sitofp %27 : vector<16x128xi32> to vector<16x128xf32>
      %cst_13 = arith.constant dense<0.000000e+00> : vector<16xf32>
      %29 = vector.multi_reduction <add>, %28, %cst_13 [1] : vector<16x128xf32> to vector<16xf32>
      %30 = vector.shape_cast %29 : vector<16xf32> to vector<16x1xf32>
      %31 = arith.addf %26, %30 : vector<16x1xf32>
      %c0_14 = arith.constant 0 : index
      %c0_15 = arith.constant 0 : index
      %32 = vector.load %arg10[%c0_14, %c0_15] : memref<16x1xf32, #tpu.memory_space<vmem>>, vector<16x1xf32>
      tpu.vector_store %arg10[%c0_14, %c0_15], %31 {strides = array<i32>} : memref<16x1xf32, #tpu.memory_space<vmem>>, vector<16x1xf32>,
    } else {
    }
    %c0_i32_2 = arith.constant 0 : i32
    %8 = arith.cmpi eq, %arg2, %c0_i32_2 : i32
    %9 = arith.extui %8 : i1 to i32
    %c0_i32_3 = arith.constant 0 : i32
    %10 = arith.cmpi ne, %9, %c0_i32_3 : i32
    scf.if %10 {
      %c0 = arith.constant 0 : index
      %c0_4 = arith.constant 0 : index
      %11 = vector.load %arg9[%c0, %c0_4] : memref<16x128xf32, #tpu.memory_space<vmem>>, vector<16x128xf32>
      %c0_5 = arith.constant 0 : index
      %c0_6 = arith.constant 0 : index
      %12 = vector.load %arg7[%c0_5, %c0_6] : memref<16x128xf32, #tpu.memory_space<vmem>>, vector<16x128xf32>
      tpu.vector_store %arg7[%c0_5, %c0_6], %11 {strides = array<i32>} : memref<16x128xf32, #tpu.memory_space<vmem>>, vector<16x128xf32>,
      %c0_7 = arith.constant 0 : index
      %c0_8 = arith.constant 0 : index
      %13 = vector.load %arg10[%c0_7, %c0_8] : memref<16x1xf32, #tpu.memory_space<vmem>>, vector<16x1xf32>
      %14 = vector.shape_cast %13 : vector<16x1xf32> to vector<16x1xf32>
      %15 = vector.broadcast %14 : vector<16x1xf32> to vector<16x128xf32>
      %c0_9 = arith.constant 0 : index
      %c0_10 = arith.constant 0 : index
      %16 = vector.load %arg8[%c0_9, %c0_10] : memref<16x128xf32, #tpu.memory_space<vmem>>, vector<16x128xf32>
      tpu.vector_store %arg8[%c0_9, %c0_10], %15 {strides = array<i32>} : memref<16x128xf32, #tpu.memory_space<vmem>>, vector<16x128xf32>,
    } else {
    }
    return
  }
  func.func @transform_0(%arg0: i32, %arg1: i32, %arg2: i32, %arg3: memref<1xi32, #tpu.memory_space<smem>>, %arg4: memref<1xi32, #tpu.memory_space<smem>>) -> (i32, i32) {
    %0 = arith.index_cast %arg0 : i32 to index
    %1 = memref.load %arg4[%0] : memref<1xi32, #tpu.memory_space<smem>>
    %2 = arith.index_cast %arg0 : i32 to index
    %3 = memref.load %arg3[%2] : memref<1xi32, #tpu.memory_space<smem>>
    %c1_i32 = arith.constant 1 : i32
    %4 = arith.subi %1, %c1_i32 : i32
    %c0_i32 = arith.constant 0 : i32
    %5 = arith.maxsi %4, %c0_i32 : i32
    %6 = arith.minsi %arg2, %5 : i32
    %7 = arith.addi %3, %6 : i32
    %c0_i32_0 = arith.constant 0 : i32
    %c0_i32_1 = arith.constant 0 : i32
    return %c0_i32_0, %7 : i32, i32
  }
  func.func @transform_1(%arg0: i32, %arg1: i32, %arg2: i32, %arg3: memref<1xi32, #tpu.memory_space<smem>>, %arg4: memref<1xi32, #tpu.memory_space<smem>>) -> (i32, i32) {
    %0 = arith.index_cast %arg0 : i32 to index
    %1 = memref.load %arg4[%0] : memref<1xi32, #tpu.memory_space<smem>>
    %2 = arith.index_cast %arg0 : i32 to index
    %3 = memref.load %arg3[%2] : memref<1xi32, #tpu.memory_space<smem>>
    %c1_i32 = arith.constant 1 : i32
    %4 = arith.subi %1, %c1_i32 : i32
    %c0_i32 = arith.constant 0 : i32
    %5 = arith.maxsi %4, %c0_i32 : i32
    %6 = arith.minsi %arg2, %5 : i32
    %7 = arith.addi %3, %6 : i32
    %c0_i32_0 = arith.constant 0 : i32
    return %7, %arg1 : i32, i32
  }
  func.func @transform_2(%arg0: i32, %arg1: i32, %arg2: i32, %arg3: memref<1xi32, #tpu.memory_space<smem>>, %arg4: memref<1xi32, #tpu.memory_space<smem>>) -> (i32, i32) {
    %c0_i32 = arith.constant 0 : i32
    return %arg0, %arg1 : i32, i32
  }
  func.func @transform_3(%arg0: i32, %arg1: i32, %arg2: i32, %arg3: memref<1xi32, #tpu.memory_space<smem>>, %arg4: memref<1xi32, #tpu.memory_space<smem>>) -> (i32, i32) {
    %c0_i32 = arith.constant 0 : i32
    %c0_i32_0 = arith.constant 0 : i32
    return %arg0, %c0_i32 : i32, i32
  }
}

</mosaic_0001>

<llo_original>
// kernel: tpu_custom_call.1
$region0: #{tpu_custom_call.1}
  #allocation0 [shape = 'u32[]', space=smem, size = 0x4, offset = 0x4, fixed_abs, tag = 'smem constant byte address 0x4 - core index']
  #allocation1 [shape = 'u32[72,128]{1,0:T(1,128)}', space=vmem, size = 0x9000, scoped, tag = 'internal scratch']
  #allocation2 [shape = 'f32[16,128]{1,0:T(8,128)}', space=vmem, size = 0x2000, scoped, tag = 'scratch operand']
  #allocation3 [shape = 'f32[16,1]{1,0:T(8,128)}', space=vmem, size = 0x2000, scoped, tag = 'scratch operand']
  #allocation4 [shape = 's32[1]{0}', space=sflag, size = 0x4, scoped, tag = 'scoped memory for tpu_custom_call.1']
  #allocation5 [shape = 's32[1]{0:T(128)S(6)}', space=smem, size = 0x200, scoped, tag = 'prefetched SMEM operand 0']
  #allocation6 [shape = 's32[1]{0:T(128)S(6)}', space=smem, size = 0x200, scoped, tag = 'prefetched SMEM operand 1']
  %s0 = inlined_call_operand.<no memory space> [shape: s32[1], index: 0, kind: input, shape index: {}]
  %s1 = inlined_call_operand.<no memory space> [shape: s32[1], index: 1, kind: input, shape index: {}]
  %s2 = inlined_call_operand.vmem [shape: s32[1,128], index: 2, kind: input, shape index: {}]
  %s3 = inlined_call_operand.hbm [shape: f32[128,128], index: 3, kind: input, shape index: {}]
  %s4 = inlined_call_operand.hbm [shape: f32[16,128], index: 4, kind: output, shape index: {0}]
  %s5 = inlined_call_operand.hbm [shape: f32[16,128], index: 5, kind: output, shape index: {1}]
  %6 = xla_tuple %s4, %s5
  %s7 = sld [smem:[#allocation0]]
  $region42: #{tpu_custom_call.1} parent=0
    _
  %s9 = ssub.s32 1, %s7
  %s10 = scalar_select 0, %s9, %s7
  %11 = sst [smem:[#allocation5]] %s0
  %12 = sst [smem:[#allocation6]] %s1
  $region1: #{tpu_custom_call.1} parent=0
    #allocation7 [shape = 'u8[65536]{0}', space=vmem, size = 0x10000, scoped, tag = 'input window, operand 3, single buffered']
    #allocation8 [shape = 's32[1]{0}', space=sflag, size = 0x4, scoped, tag = 'scoped memory for tpu_custom_call.1']
    #allocation9 [shape = 's32[1]{0}', space=sflag, size = 0x4, scoped, tag = 'scoped memory for tpu_custom_call.1']
    #allocation10 [shape = 'u8[8192]{0}', space=vmem, size = 0x2000, scoped, tag = 'output window, operand 0, single buffered']
    #allocation11 [shape = 'u8[8192]{0}', space=vmem, size = 0x2000, scoped, tag = 'output window, operand 1, single buffered']
    #allocation12 [shape = 's32[1]{0}', space=sflag, size = 0x4, scoped, tag = 'scoped memory for tpu_custom_call.1']
    %13 = vsyncpa [#allocation8], 0
    %14 = vsyncpa [#allocation9], 0
    %15 = vsyncpa [#allocation12], 0
    // Predicated region
    $region2: #{tpu_custom_call.1} parent=1 // pred_check
      _
    $region3: #{tpu_custom_call.1} parent=1 // pred_check_branch
      %17 = sbr.rel (0) target = $region5
    $region4: #{tpu_custom_call.1} parent=1 // pred_region
      %s18 = sld [smem:[#allocation6]]
      %s19 = sld [smem:[#allocation5]]
      %s20 = ssub.s32 %s18, 1
      %p21 = scmp.gt.s32.totalorder %s20, 0
      %s22 = scalar_select %p21, %s20, 0
      %p23 = scmp.lt.s32.totalorder 0, %s22
      %s24 = scalar_select %p23, 0, %s22
      %s25 = sadd.s32 %s19, %s24
      %p26 = scmp.lt.s32.totalorder %s25, 0
      %s27 = scalar_select %p26, %s25, 0
      %s28 = scalar_lea.vmem %s2, %s27
      %s29 = sld [smem:[#allocation6]]
      %s30 = sld [smem:[#allocation5]]
      %s31 = ssub.s32 %s29, 1
      %p32 = scmp.gt.s32.totalorder %s31, 0
      %s33 = scalar_select %p32, %s31, 0
      %p34 = scmp.lt.s32.totalorder 0, %s33
      %s35 = scalar_select %p34, 0, %s33
      %s36 = sadd.s32 %s30, %s35
    $region5: #{tpu_custom_call.1} parent=1 // pred_fallthru
      _
    // Predicated region
    $region6: #{tpu_custom_call.1} parent=1 // pred_check
      _
    $region7: #{tpu_custom_call.1} parent=1 // pred_check_branch
      %38 = sbr.rel (0) target = $region9
    $region8: #{tpu_custom_call.1} parent=1 // pred_region
      %s39 = sld [smem:[#allocation6]]
      %s40 = sld [smem:[#allocation5]]
      %s41 = ssub.s32 %s39, 1
      %p42 = scmp.gt.s32.totalorder %s41, 0
      %s43 = scalar_select %p42, %s41, 0
      %p44 = scmp.lt.s32.totalorder 0, %s43
      %s45 = scalar_select %p44, 0, %s43
      %s46 = sadd.s32 %s40, %s45
      %s47 = smul.u32 16, %s46
      %49 = vsyncadd [#allocation8], 0
      %s50 = smul.addr %s47, 8
      %s51 = scalar_lea.hbm %s3, %s50
      %s52 = sshll.u32 %s51, 4
      %s53 = int_to_ptr.hbm [resolvable:$true] %s52
      %s54 = sshll.u32 [#allocation7], 4
      %s55 = int_to_ptr.vmem [resolvable:$true] %s54
      %60 = dma.hbm_to_vmem [thread:$0]  %s53, 2048, %s55, [#allocation8], 128, 128, 8
    $region9: #{tpu_custom_call.1} parent=1 // pred_fallthru
      _
    // Predicated region
    $region10: #{tpu_custom_call.1} parent=1 // pred_check
      _
    $region11: #{tpu_custom_call.1} parent=1 // pred_check_branch
      %62 = sbr.rel (0) target = $region13
    $region12: #{tpu_custom_call.1} parent=1 // pred_region
      %64 = dma.done [#allocation8], 2048
    $region13: #{tpu_custom_call.1} parent=1 // pred_fallthru
      _
    %s65 = sld [smem:[#allocation6]]
    %s66 = sld [smem:[#allocation5]]
    %s67 = ssub.s32 %s65, 1
    %p68 = scmp.gt.s32.totalorder %s67, 0
    %s69 = scalar_select %p68, %s67, 0
    %p70 = scmp.lt.s32.totalorder 0, %s69
    %s71 = scalar_select %p70, 0, %s69
    %s72 = sadd.s32 %s66, %s71
    %p73 = scmp.lt.s32.totalorder %s72, 0
    %s74 = scalar_select %p73, %s72, 0
    %s75 = scalar_lea.vmem %s2, %s74
    %s76 = sld [smem:[#allocation6]]
    %s77 = sld [smem:[#allocation5]]
    %s78 = ssub.s32 %s76, 1
    %p79 = scmp.gt.s32.totalorder %s78, 0
    %s80 = scalar_select %p79, %s78, 0
    %p81 = scmp.lt.s32.totalorder 0, %s80
    %s82 = scalar_select %p81, 0, %s80
    %s83 = sadd.s32 %s77, %s82
    %p84 = scmp.lt.s32.totalorder %s83, 0
    %s85 = scalar_select %p84, %s83, 0
    %s86 = scalar_lea.vmem %s2, %s85
    %s87 = sld [smem:[#allocation6]]
    %s88 = sld [smem:[#allocation5]]
    %s89 = ssub.s32 %s87, 1
    %p90 = scmp.gt.s32.totalorder %s89, 0
    %s91 = scalar_select %p90, %s89, 0
    %p92 = scmp.lt.s32.totalorder 0, %s91
    %s93 = scalar_select %p92, 0, %s91
    %s94 = sadd.s32 %s88, %s93
    %s95 = sld [smem:[#allocation6]]
    %s96 = sld [smem:[#allocation5]]
    %s97 = ssub.s32 %s95, 1
    %p98 = scmp.gt.s32.totalorder %s97, 0
    %s99 = scalar_select %p98, %s97, 0
    %p100 = scmp.lt.s32.totalorder 0, %s99
    %s101 = scalar_select %p100, 0, %s99
    %s102 = sadd.s32 %s96, %s101
    %s103 = smul.u32 16, %s102
    %s104 = sld [smem:[#allocation6]]
    %p105 = scmp.eq.s32.totalorder 0, 0
    // Predicated region
    $region14: #{tpu_custom_call.1} parent=1 // pred_check
      %p106 = pneg %p105
    $region15: #{tpu_custom_call.1} parent=1 // pred_check_branch
      %108 = sbr.rel (%p106) target = $region17
    $region16: #{tpu_custom_call.1} parent=1 // pred_region
      %109 = vst [vmem:[#allocation2] sm:$0xff] 0.0
      %110 = vst [vmem:[#allocation2 + $0x8] sm:$0xff] 0.0
      %vm111 = vcmask 7168
      %112 = vst.msk [vmem:[#allocation3] sm:$0xff] %vm111, 0.0
      %113 = vst.msk [vmem:[#allocation3 + $0x8] sm:$0xff] %vm111, 0.0
    $region17: #{tpu_custom_call.1} parent=1 // pred_fallthru
      _
    %p114 = scmp.lt.s32.totalorder 0, %s104
    // Predicated region
    $region18: #{tpu_custom_call.1} parent=1 // pred_check
      %p115 = pneg %p114
    $region19: #{tpu_custom_call.1} parent=1 // pred_check_branch
      %117 = sbr.rel (%p115) target = $region21
    $region20: #{tpu_custom_call.1} parent=1 // pred_region
      %v118 = vlaneseq
      %v119 = vshrl.u32 %v118, 7
      %v120 = vadd.s32 %v119, 8
      %s121 = smul.u32 0, 16
      %v122 = vstv %s121
      %v123 = vadd.s32 %v119, %v122
      %v124 = vadd.s32 %v120, %v122
      %v125 = vld [vmem:[%s86] sm:$0x1]
      %v126 = vperm.slane %v125, 0
      %vm127 = vcmp.eq.s32.totalorder %v123, %v126
      %vm128 = vcmp.eq.s32.totalorder %v124, %v126
      %v129 = vsel %vm127, 1, 0
      %v130 = vsel %vm128, 1, 0
      %v131 = vcvt.s32.f32 %v129
      %v132 = vcvt.s32.f32 %v130
      %v133 = vld [vmem:[#allocation2] sm:$0xff]
      %v134 = vld [vmem:[#allocation2 + $0x8] sm:$0xff]
      %v135 = vld [vmem:[#allocation7] sm:$0xff]
      %v136 = vld [vmem:[#allocation7 + $0x8] sm:$0xff]
      %v137 = vld [vmem:[#allocation7 + $0x10] sm:$0xff]
      %v138 = vld [vmem:[#allocation7 + $0x18] sm:$0xff]
      %v139 = vld [vmem:[#allocation7 + $0x20] sm:$0xff]
      %v140 = vld [vmem:[#allocation7 + $0x28] sm:$0xff]
      %v141 = vld [vmem:[#allocation7 + $0x30] sm:$0xff]
      %v142 = vld [vmem:[#allocation7 + $0x38] sm:$0xff]
      %v143 = vld [vmem:[#allocation7 + $0x40] sm:$0xff]
      %v144 = vld [vmem:[#allocation7 + $0x48] sm:$0xff]
      %v145 = vld [vmem:[#allocation7 + $0x50] sm:$0xff]
      %v146 = vld [vmem:[#allocation7 + $0x58] sm:$0xff]
      %v147 = vld [vmem:[#allocation7 + $0x60] sm:$0xff]
      %v148 = vld [vmem:[#allocation7 + $0x68] sm:$0xff]
      %v149 = vld [vmem:[#allocation7 + $0x70] sm:$0xff]
      %v150 = vld [vmem:[#allocation7 + $0x78] sm:$0xff]
      %151 = vmatpush.msra.mxu0 %v150
      %152 = vmatpush.msra.mxu0 %v149
      %153 = vmatpush.msra.mxu0 %v148
      %154 = vmatpush.msra.mxu0 %v147
      %155 = vmatpush.msra.mxu0 %v146
      %156 = vmatpush.msra.mxu0 %v145
      %157 = vmatpush.msra.mxu0 %v144
      %158 = vmatpush.msra.mxu0 %v143
      %159 = vmatpush.msra.mxu0 %v142
      %160 = vmatpush.msra.mxu0 %v141
      %161 = vmatpush.msra.mxu0 %v140
      %162 = vmatpush.msra.mxu0 %v139
      %163 = vmatpush.msra.mxu0 %v138
      %164 = vmatpush.msra.mxu0 %v137
      %165 = vmatpush.msra.mxu0 %v136
      %166 = vmatpush.msra.mxu0 %v135
      %167 = vmatmul.f32.gmra.mxu0 %v131
      %v168 = vpop.f32.mrf.mxu0
      %v169 = vadd.f32 0.0, %v168
      %170 = vmatmul.f32.gmra.mxu0 %v132
      %v171 = vpop.f32.mrf.mxu0
      %v172 = vadd.f32 0.0, %v171
      %173 = vdwg.mxu0
      %v174 = vadd.f32 %v133, %v169
      %v175 = vadd.f32 %v134, %v172
      %176 = vst [vmem:[#allocation2] sm:$0xff] %v174
      %177 = vst [vmem:[#allocation2 + $0x8] sm:$0xff] %v175
      %v178 = vld [vmem:[#allocation3] sm:$0xff]
      %v179 = vld [vmem:[#allocation3 + $0x8] sm:$0xff]
      %180 = vadd.xlane.f32.xlu0 %v131
      %v181 = vpop.xlane.xlu0 %180
      %182 = vadd.xlane.f32.xlu0 %v132
      %v183 = vpop.xlane.xlu0 %182
      %v184 = vadd.f32 %v178, %v181
      %v185 = vadd.f32 %v179, %v183
      %vm186 = vcmask 7168
      %187 = vst.msk [vmem:[#allocation3] sm:$0xff] %vm186, %v184
      %188 = vst.msk [vmem:[#allocation3 + $0x8] sm:$0xff] %vm186, %v185
    $region21: #{tpu_custom_call.1} parent=1 // pred_fallthru
      _
    // Predicated region
    $region22: #{tpu_custom_call.1} parent=1 // pred_check
      %p189 = pneg %p105
    $region23: #{tpu_custom_call.1} parent=1 // pred_check_branch
      %191 = sbr.rel (%p189) target = $region25
    $region24: #{tpu_custom_call.1} parent=1 // pred_region
      %v192 = vld [vmem:[#allocation2] sm:$0xff]
      %v193 = vld [vmem:[#allocation2 + $0x8] sm:$0xff]
      %194 = vst [vmem:[#allocation10] sm:$0xff] %v192
      %195 = vst [vmem:[#allocation10 + $0x8] sm:$0xff] %v193
      %v196 = vld [vmem:[#allocation3] sm:$0xff]
      %v197 = vld [vmem:[#allocation3 + $0x8] sm:$0xff]
      %199 = vset.pattern.permute.xlu0 0
      %200 = vperm.xlu0 %199, %v196
      %v201 = vpop.permute.xlu0 %200
      %204 = vset.pattern.permute.xlu0 0
      %205 = vperm.xlu0 %204, %v197
      %v206 = vpop.permute.xlu0 %205
      %208 = vst [vmem:[#allocation11] sm:$0xff] %v201
      %209 = vst [vmem:[#allocation11 + $0x8] sm:$0xff] %v206
    $region25: #{tpu_custom_call.1} parent=1 // pred_fallthru
      _
    // Predicated region
    $region26: #{tpu_custom_call.1} parent=1 // pred_check
      _
    $region27: #{tpu_custom_call.1} parent=1 // pred_check_branch
      %211 = sbr.rel (0) target = $region29
    $region28: #{tpu_custom_call.1} parent=1 // pred_region
      %213 = vsyncadd [#allocation9], 0
      %s214 = sshll.u32 [#allocation10], 4
      %s215 = int_to_ptr.vmem [resolvable:$true] %s214
      %s216 = sshll.u32 %s4, 4
      %s217 = int_to_ptr.hbm [resolvable:$true] %s216
      %222 = dma.vmem_to_hbm [thread:$0]  %s215, 256, %s217, [#allocation9], 128, 128, 8
    $region29: #{tpu_custom_call.1} parent=1 // pred_fallthru
      _
    // Predicated region
    $region30: #{tpu_custom_call.1} parent=1 // pred_check
      _
    $region31: #{tpu_custom_call.1} parent=1 // pred_check_branch
      %224 = sbr.rel (0) target = $region33
    $region32: #{tpu_custom_call.1} parent=1 // pred_region
      %226 = vsyncadd [#allocation12], 0
      %s227 = sshll.u32 [#allocation11], 4
      %s228 = int_to_ptr.vmem [resolvable:$true] %s227
      %s229 = sshll.u32 %s5, 4
      %s230 = int_to_ptr.hbm [resolvable:$true] %s229
      %235 = dma.vmem_to_hbm [thread:$0]  %s228, 256, %s230, [#allocation12], 128, 128, 8
    $region33: #{tpu_custom_call.1} parent=1 // pred_fallthru
      _
    // Predicated region
    $region34: #{tpu_custom_call.1} parent=1 // pred_check
      _
    $region35: #{tpu_custom_call.1} parent=1 // pred_check_branch
      %237 = sbr.rel (0) target = $region37
    $region36: #{tpu_custom_call.1} parent=1 // pred_region
      %239 = dma.done [#allocation9], 256
    $region37: #{tpu_custom_call.1} parent=1 // pred_fallthru
      _
    // Predicated region
    $region38: #{tpu_custom_call.1} parent=1 // pred_check
      _
    $region39: #{tpu_custom_call.1} parent=1 // pred_check_branch
      %241 = sbr.rel (0) target = $region41
    $region40: #{tpu_custom_call.1} parent=1 // pred_region
      %243 = dma.done [#allocation12], 256
    $region41: #{tpu_custom_call.1} parent=1 // pred_fallthru
      _
    %244 = vsyncpa [#allocation8], 1
    %245 = vsyncpa [#allocation9], 1
    %246 = vsyncpa [#allocation12], 1

</llo_original>
